<compile_context>
chip_gen: v5e
topology: v5e:2x2
jax: 0.10.0
libtpu: 0.0.40
codegen_flags: <defaults>
</compile_context>

<pallas_src>
import math
import functools

import jax
import jax.numpy as jnp
from jax.experimental import pallas as pl
from jax.experimental.pallas import tpu as pltpu


def _make_pe(d_model: int, max_len: int) -> jnp.ndarray:
    """Deterministic sinusoidal positional-encoding table, shape [max_len, 1, d_model]."""
    position = jnp.arange(max_len, dtype=jnp.float32)[:, None]               # [max_len, 1]
    div_term = jnp.exp(jnp.arange(0, d_model, 2, dtype=jnp.float32)
                       * (-math.log(10000.0) / d_model))                     # [d_model//2]
    pe = jnp.zeros((max_len, d_model), dtype=jnp.float32)
    pe = pe.at[:, 0::2].set(jnp.sin(position * div_term))
    pe = pe.at[:, 1::2].set(jnp.cos(position * div_term))
    return pe[:, None, :]                                                    # [max_len, 1, d_model]


def _pick_seq_tile(S: int, B: int, D: int, target_bytes: int = 1 << 20) -> int:
    """Positions per block so an f32 x-block is ~1 MiB; keeps (8,128) rules legal."""
    itemsize = 4
    ideal = max(1, target_bytes // max(1, B * D * itemsize))
    if ideal >= S:
        return S                                    # single full block (tiny inputs)
    for t in range(min(ideal, S), 0, -1):
        # pe block sublane dim = t, x block sublane dim = t*B: t % 8 == 0 covers both.
        if S % t == 0 and t % 8 == 0:
            return t
    return S


def _pe_dropout_kernel(x_ref, pe_ref, keep_ref, out_ref, *, batch: int, scale: float):
    # x_ref/keep_ref/out_ref: [ts*batch, D]   pe_ref: [ts, D]   (all VMEM blocks)
    ts, d = pe_ref.shape
    # Broadcast pe over the batch axis: row (s*batch + b) of x gets pe row s.
    pe = jnp.broadcast_to(pe_ref[...][:, None, :], (ts, batch, d)).reshape(ts * batch, d)
    y = (x_ref[...] + pe) * (keep_ref[...] * scale)      # inverted dropout
    out_ref[...] = y.astype(out_ref.dtype)


def positional_encoding(x: jnp.ndarray,
                        pe_table: jnp.ndarray,
                        *,
                        p: float = 0.1,
                        training: bool = False,
                        key: jnp.ndarray | None = None) -> jnp.ndarray:
    """x: [S, B, D] float32; pe_table: [max_len, 1, D] float32 (S <= max_len)."""
    S, B, D = x.shape

    if (not training) or p <= 0.0:
        # Dropout is identity: a bare broadcast add fuses into neighbouring XLA ops;
        # a pallas_call here would only add an extra HBM round trip.
        return x + pe_table[:S]

    if key is None:
        key = jax.random.PRNGKey(0)

    rows = S * B
    x2 = x.reshape(rows, D)                              # lane/sublane-dense layout
    pe2 = pe_table[:S, 0, :]                             # [S, D]
    keep = jax.random.bernoulli(key, 1.0 - p, (rows, D)).astype(x.dtype)
    # TODO(synk): on real TPU the keep-mask could be generated in-kernel with
    # pltpu.prng_seed(seed + pl.program_id(0)) / pltpu.prng_random_bits to save one
    # HBM stream; kept in the wrapper because those primitives do not lower on the
    # CPU/interpret Pallas backend.

    ts = _pick_seq_tile(S, B, D)                         # positions per block
    tr = ts * B                                          # rows per block
    scale = 1.0 / (1.0 - p)

    kernel = functools.partial(_pe_dropout_kernel, batch=B, scale=scale)

    out2 = pl.pallas_call(
        kernel,
        out_shape=jax.ShapeDtypeStruct((rows, D), x.dtype),
        grid_spec=pltpu.PrefetchScalarGridSpec(
            num_scalar_prefetch=0,
            grid=(S // ts,),
            in_specs=[
                pl.BlockSpec((tr, D), lambda i: (i, 0)),   # x
                pl.BlockSpec((ts, D), lambda i: (i, 0)),   # pe (tracks the S tile)
                pl.BlockSpec((tr, D), lambda i: (i, 0)),   # keep mask
            ],
            out_specs=pl.BlockSpec((tr, D), lambda i: (i, 0)),
        ),
        compiler_params=pltpu.CompilerParams(
            dimension_semantics=("parallel",),             # megacore sharding on v7x
        ),
    )(x2, pe2, keep)

    return out2.reshape(S, B, D)


if __name__ == "__main__":
    # Small shapes consistent with the module: seq=8, batch=2, d_model=32, max_len=64.
    S, B, D, MAX_LEN = 8, 2, 32, 64
    P = 0.1

    key = jax.random.PRNGKey(0)
    kx, kdrop = jax.random.split(key)
    x = jax.random.normal(kx, (S, B, D), dtype=jnp.float32)
    pe_table = _make_pe(D, MAX_LEN)

    # Eval mode (dropout is identity): plain fused add, exact match vs reference.
    out_eval = jax.block_until_ready(positional_encoding(x, pe_table, p=P, training=False))
    ref_eval = x + pe_table[:S]
    assert jnp.allclose(out_eval, ref_eval, atol=1e-6, rtol=1e-6), "eval-mode mismatch"

    # Training mode: Pallas kernel (broadcast add + inverted dropout).
    out_train = jax.block_until_ready(
        positional_encoding(x, pe_table, p=P, training=True, key=kdrop))
    assert out_train.shape == (S, B, D)

    # Reference replicates the wrapper's mask draw exactly.
    keep_ref = jax.random.bernoulli(kdrop, 1.0 - P, (S * B, D)).astype(jnp.float32)
    ref_train = (x + pe_table[:S]) * keep_ref.reshape(S, B, D) / (1.0 - P)
    assert jnp.allclose(out_train, ref_train, atol=1e-5, rtol=1e-5), "train-mode mismatch"

    print("KERNEL_OK")
</pallas_src>

<mosaic_0001>
module attributes {stable_mosaic.version = 11 : i64} {
  func.func @_pe_dropout_kernel(%arg0: i32, %arg1: memref<16x32xf32, #tpu.memory_space<vmem>>, %arg2: memref<8x32xf32, #tpu.memory_space<vmem>>, %arg3: memref<16x32xf32, #tpu.memory_space<vmem>>, %arg4: memref<16x32xf32, #tpu.memory_space<vmem>>) attributes {dimension_semantics = [#tpu.dimension_semantics<parallel>], iteration_bounds = array<i64: 1>, scalar_prefetch = 0 : i64, scratch_operands = 0 : i64, tpu.core_type = #tpu.core_type<tc>, window_params = [{transform_indices = @transform_0, window_bounds = array<i64: 16, 32>}, {transform_indices = @transform_1, window_bounds = array<i64: 8, 32>}, {transform_indices = @transform_2, window_bounds = array<i64: 16, 32>}, {transform_indices = @transform_3, window_bounds = array<i64: 16, 32>}]} {
    %c0 = arith.constant 0 : index
    %c0_0 = arith.constant 0 : index
    %0 = vector.load %arg2[%c0, %c0_0] : memref<8x32xf32, #tpu.memory_space<vmem>>, vector<8x32xf32>
    %1 = vector.shape_cast %0 : vector<8x32xf32> to vector<8x1x32xf32>
    %2 = vector.shape_cast %1 : vector<8x1x32xf32> to vector<8x1x32xf32>
    %3 = vector.broadcast %2 : vector<8x1x32xf32> to vector<8x2x32xf32>
    %4 = vector.shape_cast %3 : vector<8x2x32xf32> to vector<16x32xf32>
    %c0_1 = arith.constant 0 : index
    %c0_2 = arith.constant 0 : index
    %5 = vector.load %arg1[%c0_1, %c0_2] : memref<16x32xf32, #tpu.memory_space<vmem>>, vector<16x32xf32>
    %6 = arith.addf %5, %4 : vector<16x32xf32>
    %c0_3 = arith.constant 0 : index
    %c0_4 = arith.constant 0 : index
    %7 = vector.load %arg3[%c0_3, %c0_4] : memref<16x32xf32, #tpu.memory_space<vmem>>, vector<16x32xf32>
    %cst = arith.constant 1.11111116 : f32
    %8 = vector.broadcast %cst : f32 to vector<16x32xf32>
    %9 = arith.mulf %7, %8 : vector<16x32xf32>
    %10 = arith.mulf %6, %9 : vector<16x32xf32>
    %c0_5 = arith.constant 0 : index
    %c0_6 = arith.constant 0 : index
    %11 = vector.load %arg4[%c0_5, %c0_6] : memref<16x32xf32, #tpu.memory_space<vmem>>, vector<16x32xf32>
    tpu.vector_store %arg4[%c0_5, %c0_6], %10 {strides = array<i32>} : memref<16x32xf32, #tpu.memory_space<vmem>>, vector<16x32xf32>,
    return
  }
  func.func @transform_0(%arg0: i32) -> (i32, i32) {
    %c0_i32 = arith.constant 0 : i32
    %c0_i32_0 = arith.constant 0 : i32
    return %arg0, %c0_i32 : i32, i32
  }
  func.func @transform_1(%arg0: i32) -> (i32, i32) {
    %c0_i32 = arith.constant 0 : i32
    %c0_i32_0 = arith.constant 0 : i32
    return %arg0, %c0_i32 : i32, i32
  }
  func.func @transform_2(%arg0: i32) -> (i32, i32) {
    %c0_i32 = arith.constant 0 : i32
    %c0_i32_0 = arith.constant 0 : i32
    return %arg0, %c0_i32 : i32, i32
  }
  func.func @transform_3(%arg0: i32) -> (i32, i32) {
    %c0_i32 = arith.constant 0 : i32
    %c0_i32_0 = arith.constant 0 : i32
    return %arg0, %c0_i32 : i32, i32
  }
}

</mosaic_0001>

<llo_original>
// kernel: tpu_custom_call.1
$region0: #{tpu_custom_call.1}
  #allocation0 [shape = 'u32[]', space=smem, size = 0x4, offset = 0x4, fixed_abs, tag = 'smem constant byte address 0x4 - core index']
  #allocation1 [shape = 'u32[72,128]{1,0:T(1,128)}', space=vmem, size = 0x9000, scoped, tag = 'internal scratch']
  %s0 = inlined_call_operand.hbm [shape: f32[16,32], index: 0, kind: input, shape index: {}]
  %s1 = inlined_call_operand.hbm [shape: f32[8,32], index: 1, kind: input, shape index: {}]
  %s2 = inlined_call_operand.hbm [shape: f32[16,32], index: 2, kind: input, shape index: {}]
  %s3 = inlined_call_operand.hbm [shape: f32[16,32], index: 3, kind: output, shape index: {}]
  %s4 = sld [smem:[#allocation0]]
  $region34: #{tpu_custom_call.1} parent=0
    _
  %s6 = ssub.s32 1, %s4
  %s7 = scalar_select 0, %s6, %s4
  $region1: #{tpu_custom_call.1} parent=0
    #allocation2 [shape = 'u8[8192]{0}', space=vmem, size = 0x2000, scoped, tag = 'input window, operand 0, single buffered']
    #allocation3 [shape = 's32[1]{0}', space=sflag, size = 0x4, scoped, tag = 'scoped memory for tpu_custom_call.1']
    #allocation4 [shape = 's32[1]{0}', space=sflag, size = 0x4, scoped, tag = 'scoped memory for tpu_custom_call.1']
    #allocation5 [shape = 'u8[4096]{0}', space=vmem, size = 0x1000, scoped, tag = 'input window, operand 1, single buffered']
    #allocation6 [shape = 's32[1]{0}', space=sflag, size = 0x4, scoped, tag = 'scoped memory for tpu_custom_call.1']
    #allocation7 [shape = 'u8[8192]{0}', space=vmem, size = 0x2000, scoped, tag = 'input window, operand 2, single buffered']
    #allocation8 [shape = 'u8[8192]{0}', space=vmem, size = 0x2000, scoped, tag = 'output window, operand 0, single buffered']
    %8 = vsyncpa [#allocation3], 0
    %9 = vsyncpa [#allocation6], 0
    %10 = vsyncpa [#allocation4], 0
    // Predicated region
    $region2: #{tpu_custom_call.1} parent=1 // pred_check
      _
    $region3: #{tpu_custom_call.1} parent=1 // pred_check_branch
      %12 = sbr.rel (0) target = $region5
    $region4: #{tpu_custom_call.1} parent=1 // pred_region
      %14 = vsyncadd [#allocation3], 0
      %s15 = sshll.u32 %s0, 4
      %s16 = int_to_ptr.hbm [resolvable:$true] %s15
      %s17 = sshll.u32 [#allocation2], 4
      %s18 = int_to_ptr.vmem [resolvable:$true] %s17
      %23 = dma.hbm_to_vmem [thread:$0]  %s16, 256, %s18, [#allocation3], 128, 128, 8
    $region5: #{tpu_custom_call.1} parent=1 // pred_fallthru
      _
    // Predicated region
    $region6: #{tpu_custom_call.1} parent=1 // pred_check
      _
    $region7: #{tpu_custom_call.1} parent=1 // pred_check_branch
      %25 = sbr.rel (0) target = $region9
    $region8: #{tpu_custom_call.1} parent=1 // pred_region
      %27 = vsyncadd [#allocation6], 0
      %s29 = sshll.u32 %s1, 4
      %s30 = int_to_ptr.hbm [resolvable:$true] %s29
      %s31 = sshll.u32 [#allocation5], 4
      %s32 = int_to_ptr.vmem [resolvable:$true] %s31
      %34 = dma.hbm_to_vmem [thread:$0]  %s30, 128, %s32, [#allocation6]
    $region9: #{tpu_custom_call.1} parent=1 // pred_fallthru
      _
    // Predicated region
    $region10: #{tpu_custom_call.1} parent=1 // pred_check
      _
    $region11: #{tpu_custom_call.1} parent=1 // pred_check_branch
      %36 = sbr.rel (0) target = $region13
    $region12: #{tpu_custom_call.1} parent=1 // pred_region
      %38 = vsyncadd [#allocation6], 0
      %s39 = sshll.u32 %s2, 4
      %s40 = int_to_ptr.hbm [resolvable:$true] %s39
      %s41 = sshll.u32 [#allocation7], 4
      %s42 = int_to_ptr.vmem [resolvable:$true] %s41
      %47 = dma.hbm_to_vmem [thread:$0]  %s40, 256, %s42, [#allocation6], 128, 128, 8
    $region13: #{tpu_custom_call.1} parent=1 // pred_fallthru
      _
    // Predicated region
    $region14: #{tpu_custom_call.1} parent=1 // pred_check
      _
    $region15: #{tpu_custom_call.1} parent=1 // pred_check_branch
      %49 = sbr.rel (0) target = $region17
    $region16: #{tpu_custom_call.1} parent=1 // pred_region
      %51 = dma.done [#allocation3], 256
    $region17: #{tpu_custom_call.1} parent=1 // pred_fallthru
      _
    // Predicated region
    $region18: #{tpu_custom_call.1} parent=1 // pred_check
      _
    $region19: #{tpu_custom_call.1} parent=1 // pred_check_branch
      %53 = sbr.rel (0) target = $region21
    $region20: #{tpu_custom_call.1} parent=1 // pred_region
      %55 = dma.done [#allocation6], 128
    $region21: #{tpu_custom_call.1} parent=1 // pred_fallthru
      _
    // Predicated region
    $region22: #{tpu_custom_call.1} parent=1 // pred_check
      _
    $region23: #{tpu_custom_call.1} parent=1 // pred_check_branch
      %57 = sbr.rel (0) target = $region25
    $region24: #{tpu_custom_call.1} parent=1 // pred_region
      %59 = dma.done [#allocation6], 256
    $region25: #{tpu_custom_call.1} parent=1 // pred_fallthru
      _
    %v60 = vld [vmem:[#allocation5] sm:$0xff]
    %v62 = vrot.slane %v60, 1
    %v63 = vrot.slane %v60, 2
    %v64 = vrot.slane %v60, 3
    %v65 = vrot.slane %v60, 4
    %v66 = vrot.slane %v60, 5
    %v67 = vrot.slane %v60, 6
    %v68 = vrot.slane %v60, 7
    %v69 = vperm.slane %v60, 0
    %v70 = vperm.slane %v62, 0
    %v71 = vperm.slane %v63, 0
    %v72 = vperm.slane %v64, 0
    %v73 = vperm.slane %v65, 0
    %v74 = vperm.slane %v66, 0
    %v75 = vperm.slane %v67, 0
    %v76 = vperm.slane %v68, 0
    %v77 = vld [vmem:[#allocation2] sm:$0xff]
    %v78 = vld [vmem:[#allocation2 + $0x8] sm:$0xff]
    %79 = vst [vmem:[#allocation1] ss:$4 sm:$0xff] %v69
    %s80 = scalar_lea.vmem [#allocation1], 1
    %81 = vst [vmem:[%s80] ss:$4 sm:$0xff] %v70
    %s82 = scalar_lea.vmem [#allocation1], 2
    %83 = vst [vmem:[%s82] ss:$4 sm:$0xff] %v71
    %s84 = scalar_lea.vmem [#allocation1], 3
    %85 = vst [vmem:[%s84] ss:$4 sm:$0xff] %v72
    %s86 = scalar_lea.vmem [#allocation1], 32
    %87 = vst [vmem:[%s86] ss:$4 sm:$0xff] %v73
    %s88 = scalar_lea.vmem [#allocation1], 33
    %89 = vst [vmem:[%s88] ss:$4 sm:$0xff] %v74
    %s90 = scalar_lea.vmem [#allocation1], 34
    %91 = vst [vmem:[%s90] ss:$4 sm:$0xff] %v75
    %s92 = scalar_lea.vmem [#allocation1], 35
    %93 = vst [vmem:[%s92] ss:$4 sm:$0xff] %v76
    %v94 = vld.sshfl [vmem:[#allocation1] sm:$0xff pattern:$0x73625140]
    %v95 = vld.sshfl [vmem:[#allocation1 + $0x20] sm:$0xff pattern:$0x73625140]
    %v98 = vadd.f32 %v77, %v94
    %v99 = vadd.f32 %v78, %v95
    %v100 = vld [vmem:[#allocation7] sm:$0xff]
    %v101 = vld [vmem:[#allocation7 + $0x8] sm:$0xff]
    %v102 = vmul.f32 %v100, 1.1111112
    %v103 = vmul.f32 %v101, 1.1111112
    %v104 = vmul.f32 %v98, %v102
    %v105 = vmul.f32 %v99, %v103
    %vm106 = vcmask 261120
    %107 = vst.msk [vmem:[#allocation8] sm:$0xff] %vm106, %v104
    %108 = vst.msk [vmem:[#allocation8 + $0x8] sm:$0xff] %vm106, %v105
    // Predicated region
    $region26: #{tpu_custom_call.1} parent=1 // pred_check
      _
    $region27: #{tpu_custom_call.1} parent=1 // pred_check_branch
      %110 = sbr.rel (0) target = $region29
    $region28: #{tpu_custom_call.1} parent=1 // pred_region
      %112 = vsyncadd [#allocation4], 0
      %s113 = sshll.u32 [#allocation8], 4
      %s114 = int_to_ptr.vmem [resolvable:$true] %s113
      %s115 = sshll.u32 %s3, 4
      %s116 = int_to_ptr.hbm [resolvable:$true] %s115
      %121 = dma.vmem_to_hbm [thread:$0]  %s114, 256, %s116, [#allocation4], 128, 128, 8
    $region29: #{tpu_custom_call.1} parent=1 // pred_fallthru
      _
    // Predicated region
    $region30: #{tpu_custom_call.1} parent=1 // pred_check
      _
    $region31: #{tpu_custom_call.1} parent=1 // pred_check_branch
      %123 = sbr.rel (0) target = $region33
    $region32: #{tpu_custom_call.1} parent=1 // pred_region
      %125 = dma.done [#allocation4], 256
    $region33: #{tpu_custom_call.1} parent=1 // pred_fallthru
      _
    %126 = vsyncpa [#allocation3], 1
    %127 = vsyncpa [#allocation6], 1
    %128 = vsyncpa [#allocation4], 1

</llo_original>
